<compile_context>
chip_gen: v7x
topology: tpu7x:2x2x1
jax: 0.10.0
libtpu: 0.0.40
codegen_flags: <defaults>
</compile_context>

<pallas_src>
import functools

import jax
import jax.numpy as jnp
from jax.experimental import pallas as pl
from jax.experimental.pallas import tpu as pltpu

MARGIN = 0.2
LOCAL_W = 0.25
GLOBAL_W = 0.25
EPS = 1e-6                     # torch.nn.functional.pairwise_distance default eps
_MIN_PALLAS_BYTES = 1 << 20    # below this, the XLA-fused path wins (launch overhead)


def _triplet_term_kernel(shift_ref, doc_ref, q_ref, out_ref, acc_pos, acc_neg):
    """One D-tile of the TripletMarginLoss term.

    shift_ref : SMEM (1,) int32  -- runtime roll shift (scalar prefetch)
    doc_ref   : VMEM (B, TD)     -- anchor tile
    q_ref     : VMEM (B, TD)     -- positive tile
    out_ref   : VMEM (1, 1) f32  -- triplet-margin loss (written at last step only)
    acc_pos / acc_neg : VMEM (B, 1) f32 -- running sum-of-squares across D-tiles
    """
    step = pl.program_id(0)

    @pl.when(step == 0)
    def _():
        acc_pos[...] = jnp.zeros_like(acc_pos)
        acc_neg[...] = jnp.zeros_like(acc_neg)

    doc = doc_ref[...].astype(jnp.float32)   # native-dtype DMA, f32 math
    qry = q_ref[...].astype(jnp.float32)
    b = doc.shape[0]

    # negative = torch.roll(query, shift, dims=0): neg[i] = query[(i - s) mod B].
    # Built as a permutation matmul so the shift can be a runtime scalar and rows are
    # gathered exactly for any B (no sublane-padding hazard). MXU is otherwise idle.
    s = shift_ref[0]
    row = jax.lax.broadcasted_iota(jnp.int32, (b, b), 0)
    col = jax.lax.broadcasted_iota(jnp.int32, (b, b), 1)
    perm = jnp.logical_or(col == row - s, col == row - s + b).astype(jnp.float32)
    qneg = jnp.dot(perm, qry, preferred_element_type=jnp.float32)

    # F.pairwise_distance adds eps element-wise to the difference before squaring.
    acc_pos[...] += jnp.sum(jnp.square(doc - qry + EPS), axis=-1, keepdims=True)
    acc_neg[...] += jnp.sum(jnp.square(doc - qneg + EPS), axis=-1, keepdims=True)

    @pl.when(step == pl.num_programs(0) - 1)
    def _():
        d_pos = jnp.sqrt(acc_pos[...])
        d_neg = jnp.sqrt(acc_neg[...])
        trip = jnp.mean(jnp.maximum(d_pos - d_neg + MARGIN, 0.0))
        out_ref[...] = jnp.broadcast_to(trip, (1, 1))


def _pick_tile_d(d):
    for cand in (512, 256, 128):
        if d % cand == 0:
            return cand
    # TODO(synk): D not a multiple of 128 falls back to a single full-D block
    # (correct but unpipelined); pad D in the caller for ragged hidden sizes.
    return d


def _triplet_term_pallas(doc_embs, query_embs, shift, tile_d):
    b, d = doc_embs.shape
    kd = d // tile_d
    itemsize = jnp.dtype(doc_embs.dtype).itemsize
    # Per-step VMEM = 2 inputs * 2 buffers * B * tile_d * itemsize — well under the
    # scoped defaults on v5e/v6e/v7x at these tile sizes, so no vmem_limit bump needed.
    # TODO(synk): on v7x (2 TensorCores) a further "parallel" split over B with
    # per-block partial sums would roughly halve wall time for large B*D.
    out = pl.pallas_call(
        _triplet_term_kernel,
        out_shape=jax.ShapeDtypeStruct((1, 1), jnp.float32),
        grid_spec=pltpu.PrefetchScalarGridSpec(
            num_scalar_prefetch=1,
            grid=(kd,),
            in_specs=[
                pl.BlockSpec((b, tile_d), lambda i, s_ref: (0, i)),
                pl.BlockSpec((b, tile_d), lambda i, s_ref: (0, i)),
            ],
            out_specs=pl.BlockSpec((1, 1), lambda i, s_ref: (0, 0)),
            scratch_shapes=[
                pltpu.VMEM((b, 1), jnp.float32),
                pltpu.VMEM((b, 1), jnp.float32),
            ],
        ),
        compiler_params=pltpu.CompilerParams(
            dimension_semantics=("arbitrary",),   # reduction over D-tiles
        ),
        cost_estimate=pl.CostEstimate(
            flops=2 * b * b * d + 8 * b * d + 8 * b,
            transcendentals=2 * b,
            bytes_accessed=2 * b * d * itemsize + 8,
        ),
    )(shift, doc_embs, query_embs)
    return out[0, 0]


def _triplet_term_ref(doc_embs, query_embs, shift):
    doc = doc_embs.astype(jnp.float32)
    qry = query_embs.astype(jnp.float32)
    qneg = jnp.roll(qry, shift, axis=0)
    d_pos = jnp.sqrt(jnp.sum(jnp.square(doc - qry + EPS), axis=-1))
    d_neg = jnp.sqrt(jnp.sum(jnp.square(doc - qneg + EPS), axis=-1))
    return jnp.mean(jnp.maximum(d_pos - d_neg + MARGIN, 0.0))


def triplet_loss(local_pos_dist, local_neg_dist, global_pos_dist, global_neg_dist,
                 doc_embs, query_embs, roll_shift=1, *, tile_d=None, use_pallas=None):
    """Mirrors TripletLoss.forward.

    roll_shift replaces torch's random.randint(1, B-1); it is consumed as a *runtime*
    int32 scalar so distinct shifts do not trigger recompiles.
    """
    b, d = doc_embs.shape

    # Hungarian hinge: tiny element-wise work, best left to the XLA fusion around the call.
    hung = jnp.mean(
        LOCAL_W * jnp.maximum(local_pos_dist.astype(jnp.float32)
                              - local_neg_dist.astype(jnp.float32) + MARGIN, 0.0)
        + GLOBAL_W * jnp.maximum(global_pos_dist.astype(jnp.float32)
                                 - global_neg_dist.astype(jnp.float32) + MARGIN, 0.0))

    # TODO(synk): torch raises for B == 1 (randint(1, 0)); here B == 1 degenerates to
    # shift 0 (negative == positive) instead of raising.
    shift = jnp.asarray(roll_shift, dtype=jnp.int32) % b

    if use_pallas is None:
        use_pallas = 2 * b * d * jnp.dtype(doc_embs.dtype).itemsize >= _MIN_PALLAS_BYTES
    if not use_pallas:
        return hung + _triplet_term_ref(doc_embs, query_embs, shift)

    if tile_d is None:
        tile_d = _pick_tile_d(d)
    if tile_d != d and (d % tile_d != 0 or tile_d % 128 != 0):
        raise ValueError(f"tile_d={tile_d} must divide D={d} and be a multiple of 128")

    trip = _triplet_term_pallas(doc_embs, query_embs, shift.reshape((1,)), tile_d)
    return hung + trip


if __name__ == "__main__":
    B, D = 8, 512
    key = jax.random.PRNGKey(0)
    k = jax.random.split(key, 6)

    local_pos = jax.random.uniform(k[0], (B,), jnp.float32)
    local_neg = jax.random.uniform(k[1], (B,), jnp.float32)
    global_pos = jax.random.uniform(k[2], (B,), jnp.float32)
    global_neg = jax.random.uniform(k[3], (B,), jnp.float32)
    doc_embs = jax.random.normal(k[4], (B, D), jnp.float32)
    query_embs = jax.random.normal(k[5], (B, D), jnp.float32)

    # One jitted callable serves every shift (roll_shift is a runtime operand);
    # tile_d=128 gives a 4-step grid here to exercise the accumulator pipeline.
    loss_fn = jax.jit(functools.partial(triplet_loss, tile_d=128, use_pallas=True))

    def ref(shift):
        ll = LOCAL_W * jnp.maximum(local_pos - local_neg + MARGIN, 0.0)
        gl = GLOBAL_W * jnp.maximum(global_pos - global_neg + MARGIN, 0.0)
        qneg = jnp.roll(query_embs, shift, axis=0)
        dp = jnp.sqrt(jnp.sum(jnp.square(doc_embs - query_embs + EPS), axis=-1))
        dn = jnp.sqrt(jnp.sum(jnp.square(doc_embs - qneg + EPS), axis=-1))
        return jnp.mean(ll + gl) + jnp.mean(jnp.maximum(dp - dn + MARGIN, 0.0))

    # Two different shifts (stand-ins for random.randint(1, B-1)); same compile both times.
    for shift_val in (3, 5):
        shift = jnp.asarray(shift_val, jnp.int32)
        loss = loss_fn(local_pos, local_neg, global_pos, global_neg,
                       doc_embs, query_embs, shift)
        jax.block_until_ready(loss)
        expected = ref(shift)
        assert jnp.allclose(loss, expected, rtol=1e-5, atol=1e-4), (shift_val, loss, expected)

    print("KERNEL_OK")
</pallas_src>

<mosaic_0001>
module attributes {stable_mosaic.version = 11 : i64} {
  func.func @_triplet_term_kernel(%arg0: i32, %arg1: memref<1xi32, #tpu.memory_space<smem>>, %arg2: memref<8x128xf32, #tpu.memory_space<vmem>>, %arg3: memref<8x128xf32, #tpu.memory_space<vmem>>, %arg4: memref<1x1xf32, #tpu.memory_space<vmem>>, %arg5: memref<8x1xf32, #tpu.memory_space<vmem>>, %arg6: memref<8x1xf32, #tpu.memory_space<vmem>>) attributes {dimension_semantics = [#tpu.dimension_semantics<arbitrary>], iteration_bounds = array<i64: 4>, scalar_prefetch = 1 : i64, scratch_operands = 2 : i64, tpu.core_type = #tpu.core_type<tc>, window_params = [{transform_indices = @transform_0, window_bounds = array<i64: 8, 128>}, {transform_indices = @transform_1, window_bounds = array<i64: 8, 128>}, {pipeline_mode = #tpu.pipeline_mode<synchronous>, transform_indices = @transform_2, window_bounds = array<i64: 1, 1>}]} {
    %c0_i32 = arith.constant 0 : i32
    %0 = arith.cmpi eq, %arg0, %c0_i32 : i32
    %1 = arith.extui %0 : i1 to i32
    %c0_i32_0 = arith.constant 0 : i32
    %2 = arith.cmpi ne, %1, %c0_i32_0 : i32
    scf.if %2 {
      %cst_18 = arith.constant 0.000000e+00 : f32
      %41 = vector.broadcast %cst_18 : f32 to vector<8x1xf32>
      %c0_19 = arith.constant 0 : index
      %c0_20 = arith.constant 0 : index
      %42 = vector.load %arg5[%c0_19, %c0_20] : memref<8x1xf32, #tpu.memory_space<vmem>>, vector<8x1xf32>
      tpu.vector_store %arg5[%c0_19, %c0_20], %41 {strides = array<i32>} : memref<8x1xf32, #tpu.memory_space<vmem>>, vector<8x1xf32>,
      %cst_21 = arith.constant 0.000000e+00 : f32
      %43 = vector.broadcast %cst_21 : f32 to vector<8x1xf32>
      %c0_22 = arith.constant 0 : index
      %c0_23 = arith.constant 0 : index
      %44 = vector.load %arg6[%c0_22, %c0_23] : memref<8x1xf32, #tpu.memory_space<vmem>>, vector<8x1xf32>
      tpu.vector_store %arg6[%c0_22, %c0_23], %43 {strides = array<i32>} : memref<8x1xf32, #tpu.memory_space<vmem>>, vector<8x1xf32>,
    } else {
    }
    %c0 = arith.constant 0 : index
    %c0_1 = arith.constant 0 : index
    %3 = vector.load %arg2[%c0, %c0_1] : memref<8x128xf32, #tpu.memory_space<vmem>>, vector<8x128xf32>
    %c0_2 = arith.constant 0 : index
    %c0_3 = arith.constant 0 : index
    %4 = vector.load %arg3[%c0_2, %c0_3] : memref<8x128xf32, #tpu.memory_space<vmem>>, vector<8x128xf32>
    %c0_4 = arith.constant 0 : index
    %5 = memref.load %arg1[%c0_4] : memref<1xi32, #tpu.memory_space<smem>>
    %6 = tpu.iota {dimensions = array<i32: 0>} : vector<8x8xi32>
    %7 = tpu.iota {dimensions = array<i32: 1>} : vector<8x8xi32>
    %8 = vector.broadcast %5 : i32 to vector<8x8xi32>
    %9 = arith.subi %6, %8 : vector<8x8xi32>
    %10 = arith.cmpi eq, %7, %9 : vector<8x8xi32>
    %11 = vector.broadcast %5 : i32 to vector<8x8xi32>
    %12 = arith.subi %6, %11 : vector<8x8xi32>
    %c8_i32 = arith.constant 8 : i32
    %13 = vector.broadcast %c8_i32 : i32 to vector<8x8xi32>
    %14 = arith.addi %12, %13 : vector<8x8xi32>
    %15 = arith.cmpi eq, %7, %14 : vector<8x8xi32>
    %16 = arith.ori %10, %15 : vector<8x8xi1>
    %17 = arith.extui %16 : vector<8x8xi1> to vector<8x8xi32>
    %18 = arith.sitofp %17 : vector<8x8xi32> to vector<8x8xf32>
    %cst = arith.constant dense<0.000000e+00> : vector<8x128xf32>
    %19 = tpu.matmul %18, %4, %cst {dimension_numbers = #tpu.dot_dimension_numbers<[1], [0], [0], [1], [0, 0, 1, 1], [], []>} : vector<8x8xf32>, vector<8x128xf32>, vector<8x128xf32> -> vector<8x128xf32>
    %c0_5 = arith.constant 0 : index
    %c0_6 = arith.constant 0 : index
    %20 = vector.load %arg5[%c0_5, %c0_6] : memref<8x1xf32, #tpu.memory_space<vmem>>, vector<8x1xf32>
    %21 = arith.subf %3, %4 : vector<8x128xf32>
    %cst_7 = arith.constant 9.99999997E-7 : f32
    %22 = vector.broadcast %cst_7 : f32 to vector<8x128xf32>
    %23 = arith.addf %21, %22 : vector<8x128xf32>
    %24 = arith.mulf %23, %23 : vector<8x128xf32>
    %cst_8 = arith.constant dense<0.000000e+00> : vector<8xf32>
    %25 = vector.multi_reduction <add>, %24, %cst_8 [1] : vector<8x128xf32> to vector<8xf32>
    %26 = vector.shape_cast %25 : vector<8xf32> to vector<8x1xf32>
    %27 = arith.addf %20, %26 : vector<8x1xf32>
    %c0_9 = arith.constant 0 : index
    %c0_10 = arith.constant 0 : index
    %28 = vector.load %arg5[%c0_9, %c0_10] : memref<8x1xf32, #tpu.memory_space<vmem>>, vector<8x1xf32>
    tpu.vector_store %arg5[%c0_9, %c0_10], %27 {strides = array<i32>} : memref<8x1xf32, #tpu.memory_space<vmem>>, vector<8x1xf32>,
    %c0_11 = arith.constant 0 : index
    %c0_12 = arith.constant 0 : index
    %29 = vector.load %arg6[%c0_11, %c0_12] : memref<8x1xf32, #tpu.memory_space<vmem>>, vector<8x1xf32>
    %30 = arith.subf %3, %19 : vector<8x128xf32>
    %cst_13 = arith.constant 9.99999997E-7 : f32
    %31 = vector.broadcast %cst_13 : f32 to vector<8x128xf32>
    %32 = arith.addf %30, %31 : vector<8x128xf32>
    %33 = arith.mulf %32, %32 : vector<8x128xf32>
    %cst_14 = arith.constant dense<0.000000e+00> : vector<8xf32>
    %34 = vector.multi_reduction <add>, %33, %cst_14 [1] : vector<8x128xf32> to vector<8xf32>
    %35 = vector.shape_cast %34 : vector<8xf32> to vector<8x1xf32>
    %36 = arith.addf %29, %35 : vector<8x1xf32>
    %c0_15 = arith.constant 0 : index
    %c0_16 = arith.constant 0 : index
    %37 = vector.load %arg6[%c0_15, %c0_16] : memref<8x1xf32, #tpu.memory_space<vmem>>, vector<8x1xf32>
    tpu.vector_store %arg6[%c0_15, %c0_16], %36 {strides = array<i32>} : memref<8x1xf32, #tpu.memory_space<vmem>>, vector<8x1xf32>,
    %c3_i32 = arith.constant 3 : i32
    %38 = arith.cmpi eq, %arg0, %c3_i32 : i32
    %39 = arith.extui %38 : i1 to i32
    %c0_i32_17 = arith.constant 0 : i32
    %40 = arith.cmpi ne, %39, %c0_i32_17 : i32
    scf.if %40 {
      %c0_18 = arith.constant 0 : index
      %c0_19 = arith.constant 0 : index
      %41 = vector.load %arg5[%c0_18, %c0_19] : memref<8x1xf32, #tpu.memory_space<vmem>>, vector<8x1xf32>
      %42 = math.sqrt %41 : vector<8x1xf32>
      %c0_20 = arith.constant 0 : index
      %c0_21 = arith.constant 0 : index
      %43 = vector.load %arg6[%c0_20, %c0_21] : memref<8x1xf32, #tpu.memory_space<vmem>>, vector<8x1xf32>
      %44 = math.sqrt %43 : vector<8x1xf32>
      %45 = arith.subf %42, %44 : vector<8x1xf32>
      %cst_22 = arith.constant 2.000000e-01 : f32
      %46 = vector.broadcast %cst_22 : f32 to vector<8x1xf32>
      %47 = arith.addf %45, %46 : vector<8x1xf32>
      %cst_23 = arith.constant 0.000000e+00 : f32
      %48 = vector.broadcast %cst_23 : f32 to vector<8x1xf32>
      %49 = arith.maximumf %47, %48 : vector<8x1xf32>
      %50 = vector.shape_cast %49 : vector<8x1xf32> to vector<1x8x1xf32>
      %cst_24 = arith.constant dense<0.000000e+00> : vector<1xf32>
      %51 = vector.multi_reduction <add>, %50, %cst_24 [1, 2] : vector<1x8x1xf32> to vector<1xf32>
      %52 = vector.shape_cast %51 : vector<1xf32> to vector<1x1x1xf32>
      %53 = vector.extract %52[0, 0, 0] : f32 from vector<1x1x1xf32>
      %cst_25 = arith.constant 8.000000e+00 : f32
      %54 = arith.divf %53, %cst_25 : f32
      %55 = vector.broadcast %54 : f32 to vector<1x1xf32>
      %c0_26 = arith.constant 0 : index
      %c0_27 = arith.constant 0 : index
      %56 = vector.load %arg4[%c0_26, %c0_27] : memref<1x1xf32, #tpu.memory_space<vmem>>, vector<1x1xf32>
      tpu.vector_store %arg4[%c0_26, %c0_27], %55 {strides = array<i32>} : memref<1x1xf32, #tpu.memory_space<vmem>>, vector<1x1xf32>,
    } else {
    }
    return
  }
  func.func @transform_0(%arg0: i32, %arg1: memref<1xi32, #tpu.memory_space<smem>>) -> (i32, i32) {
    %c0_i32 = arith.constant 0 : i32
    %c0_i32_0 = arith.constant 0 : i32
    return %c0_i32, %arg0 : i32, i32
  }
  func.func @transform_1(%arg0: i32, %arg1: memref<1xi32, #tpu.memory_space<smem>>) -> (i32, i32) {
    %c0_i32 = arith.constant 0 : i32
    %c0_i32_0 = arith.constant 0 : i32
    return %c0_i32, %arg0 : i32, i32
  }
  func.func @transform_2(%arg0: i32, %arg1: memref<1xi32, #tpu.memory_space<smem>>) -> (i32, i32) {
    %c0_i32 = arith.constant 0 : i32
    %c0_i32_0 = arith.constant 0 : i32
    %c0_i32_1 = arith.constant 0 : i32
    return %c0_i32, %c0_i32_0 : i32, i32
  }
}

</mosaic_0001>

<llo_original>
// kernel: triplet_loss.1
$region0: #{triplet_loss.1}
  #allocation0 [shape = 'u32[]', space=smem, size = 0x4, offset = 0x4, fixed_abs, tag = 'smem constant byte address 0x4 - core index']
  #allocation1 [shape = 'u32[144,128]{1,0:T(1,128)}', space=vmem, size = 0x12000, scoped, tag = 'internal scratch']
  #allocation2 [shape = 'f32[8,1]{1,0:T(8,128)}', space=vmem, size = 0x1000, scoped, tag = 'scratch operand']
  #allocation3 [shape = 'f32[8,1]{1,0:T(8,128)}', space=vmem, size = 0x1000, scoped, tag = 'scratch operand']
  #allocation4 [shape = 's32[1]{0}', space=sflag, size = 0x4, scoped, tag = 'scoped memory for triplet_loss.1']
  #allocation5 [shape = 's32[1]{0:T(128)S(6)}', space=smem, size = 0x200, scoped, tag = 'prefetched SMEM operand 0']
  %s0 = inlined_call_operand.<no memory space> [shape: s32[1], index: 0, kind: input, shape index: {}]
  %s1 = inlined_call_operand.vmem [shape: f32[8,512], index: 1, kind: input, shape index: {}]
  %s2 = inlined_call_operand.vmem [shape: f32[8,512], index: 2, kind: input, shape index: {}]
  %s3 = inlined_call_operand.hbm [shape: f32[1,1], index: 3, kind: output, shape index: {}]
  %s4 = sld [smem:[#allocation0]]
  $region49: #{triplet_loss.1} parent=0
    _
  %s6 = ssub.s32 1, %s4
  %s7 = scalar_select 0, %s6, %s4
  %8 = sst [smem:[#allocation5]] %s0
  $region1: #{triplet_loss.1} parent=0
    #allocation6 [shape = 'u8[512]{0}', space=vmem, size = 0x400, scoped, tag = 'output window, operand 0, single buffered']
    #allocation7 [shape = 's32[2]{0}', space=sflag, size = 0x8, scoped, tag = 'scoped memory for triplet_loss.1']
    %9 = vsyncpa [#allocation7], 0
    loop: start=0, step=1, limit=6
    $region2: #{triplet_loss.1} parent=1 // loop_pre_header
      _
    $region3: #{triplet_loss.1} parent=1 // loop_header
      %s11 = sphi 0, %s15
      %p12 = scmp.ge.s32.totalorder %s11, 6
      %s21 = sphi 0, %s23
      %s24 = sphi 0, %s21
      %s25 = sphi 0, %s24
      %s41 = sphi 0, %s25
      %s47 = sphi 0, %s49
      %s50 = sphi 0, %s47
      %s51 = sphi 0, %s50
      %s67 = sphi 0, %s51
      %s71 = sphi 0, %s71
      %s73 = sphi 0, %s71
      %s74 = sphi 0, %s73
      %s88 = sphi 0, %s74
    $region4: #{triplet_loss.1} parent=1 // loop_header_branch
      %14 = sbr.rel (%p12) target = $region8
    $region5: #{triplet_loss.1} parent=1 // loop_body
      %s16 = ssub.s32 %s11, 1
      %s17 = ssub.s32 %s11, 2
      %s18 = sadd.s32 %s11, 1
      %s19 = ssub.s32 %s11, %s18
      %p20 = scmp.eq.s32.totalorder %s19, 0
      %s22 = sadd.s32 %s21, 1
      %s23 = scalar_select %p20, %s21, %s22
      %p26 = pneg %p20
      %p27 = scmp.eq.s32.totalorder %s11, 3
      %p28 = por %p26, %p27
      %p29 = scmp.ne.s32.totalorder %s21, %s24
      %p30 = scmp.eq.s32.totalorder %s11, 0
      %p31 = por %p29, %p30
      %p32 = scmp.ne.s32.totalorder %s21, %s24
      %p33 = scmp.eq.s32.totalorder %s16, 3
      %p34 = por %p32, %p33
      %p35 = scmp.ne.s32.totalorder %s24, %s25
      %p36 = scmp.eq.s32.totalorder %s16, 0
      %p37 = por %p35, %p36
      %p38 = scmp.ne.s32.totalorder %s24, %s25
      %p39 = scmp.eq.s32.totalorder %s17, 3
      %p40 = por %p38, %p39
      %p42 = scmp.ne.s32.totalorder %s25, %s41
      %p43 = scmp.eq.s32.totalorder %s17, 0
      %p44 = por %p42, %p43
      %s45 = ssub.s32 %s11, %s18
      %p46 = scmp.eq.s32.totalorder %s45, 0
      %s48 = sadd.s32 %s47, 1
      %s49 = scalar_select %p46, %s47, %s48
      %p52 = pneg %p46
      %p53 = scmp.eq.s32.totalorder %s11, 3
      %p54 = por %p52, %p53
      %p55 = scmp.ne.s32.totalorder %s47, %s50
      %p56 = scmp.eq.s32.totalorder %s11, 0
      %p57 = por %p55, %p56
      %p58 = scmp.ne.s32.totalorder %s47, %s50
      %p59 = scmp.eq.s32.totalorder %s16, 3
      %p60 = por %p58, %p59
      %p61 = scmp.ne.s32.totalorder %s50, %s51
      %p62 = scmp.eq.s32.totalorder %s16, 0
      %p63 = por %p61, %p62
      %p64 = scmp.ne.s32.totalorder %s50, %s51
      %p65 = scmp.eq.s32.totalorder %s17, 3
      %p66 = por %p64, %p65
      %p68 = scmp.ne.s32.totalorder %s51, %s67
      %p69 = scmp.eq.s32.totalorder %s17, 0
      %p70 = por %p68, %p69
      %s72 = sadd.s32 %s71, 1
      %p75 = scmp.eq.s32.totalorder %s11, 3
      %p76 = scmp.ne.s32.totalorder %s71, %s73
      %p77 = scmp.eq.s32.totalorder %s11, 0
      %p78 = por %p76, %p77
      %p79 = scmp.ne.s32.totalorder %s71, %s73
      %p80 = scmp.eq.s32.totalorder %s16, 3
      %p81 = por %p79, %p80
      %p82 = scmp.ne.s32.totalorder %s73, %s74
      %p83 = scmp.eq.s32.totalorder %s16, 0
      %p84 = por %p82, %p83
      %p85 = scmp.ne.s32.totalorder %s73, %s74
      %p86 = scmp.eq.s32.totalorder %s17, 3
      %p87 = por %p85, %p86
      %p89 = scmp.ne.s32.totalorder %s74, %s88
      %p90 = scmp.eq.s32.totalorder %s17, 0
      %p91 = por %p89, %p90
      %p92 = scmp.le.s32.totalorder 1, %s11
      %p93 = scmp.lt.s32.totalorder %s11, 5
      %p94 = pnand %p92, %p93
      %p95 = pneg %p94
      // Predicated region
      $region9: #{triplet_loss.1} parent=5 // pred_check
        _
      $region10: #{triplet_loss.1} parent=5 // pred_check_branch
        %97 = sbr.rel (%p94) target = $region12
      $region11: #{triplet_loss.1} parent=5 // pred_region
        %s98 = ssub.s32 %s11, 1
      $region12: #{triplet_loss.1} parent=5 // pred_fallthru
        _
      %p99 = scmp.lt.s32.totalorder %s11, 4
      // Predicated region
      $region13: #{triplet_loss.1} parent=5 // pred_check
        %p100 = pneg %p99
      $region14: #{triplet_loss.1} parent=5 // pred_check_branch
        %102 = sbr.rel (%p100) target = $region16
      $region15: #{triplet_loss.1} parent=5 // pred_region
        // Predicated region
        $region17: #{triplet_loss.1} parent=15 // pred_check
          %p103 = pneg %p31
        $region18: #{triplet_loss.1} parent=15 // pred_check_branch
          %105 = sbr.rel (%p103) target = $region20
        $region19: #{triplet_loss.1} parent=15 // pred_region
          %p106 = scmp.lt.s32.totalorder %s11, 3
          %s107 = scalar_select %p106, %s11, 3
          %s108 = smul.addr %s107, 8
          %s109 = scalar_lea.vmem %s1, %s108
        $region20: #{triplet_loss.1} parent=15 // pred_fallthru
          _
        // Predicated region
        $region21: #{triplet_loss.1} parent=15 // pred_check
          %p110 = pneg %p57
        $region22: #{triplet_loss.1} parent=15 // pred_check_branch
          %112 = sbr.rel (%p110) target = $region24
        $region23: #{triplet_loss.1} parent=15 // pred_region
          %p113 = scmp.lt.s32.totalorder %s11, 3
          %s114 = scalar_select %p113, %s11, 3
          %s115 = smul.addr %s114, 8
          %s116 = scalar_lea.vmem %s2, %s115
        $region24: #{triplet_loss.1} parent=15 // pred_fallthru
          _
      $region16: #{triplet_loss.1} parent=5 // pred_fallthru
        _
      %p117 = scmp.le.s32.totalorder 1, %s11
      %p118 = scmp.lt.s32.totalorder %s11, 5
      %p119 = pnand %p117, %p118
      %p120 = pneg %p119
      // Predicated region
      $region25: #{triplet_loss.1} parent=5 // pred_check
        _
      $region26: #{triplet_loss.1} parent=5 // pred_check_branch
        %122 = sbr.rel (%p119) target = $region28
      $region27: #{triplet_loss.1} parent=5 // pred_region
        %s123 = ssub.s32 %s11, 1
        %p124 = scmp.lt.s32.totalorder %s16, 3
        %s125 = scalar_select %p124, %s16, 3
        %s126 = smul.addr %s125, 8
        %s127 = scalar_lea.vmem %s1, %s126
        %p128 = pneg %p37
        %p129 = pneg %p34
        %p130 = scmp.lt.s32.totalorder %s16, 3
        %s131 = scalar_select %p130, %s16, 3
        %s132 = smul.addr %s131, 8
        %s133 = scalar_lea.vmem %s2, %s132
        %p134 = pneg %p63
        %p135 = pneg %p60
        %p136 = pneg %p84
        %p137 = pneg %p81
        %p138 = scmp.lt.s32.totalorder %s16, 3
        %s139 = scalar_select %p138, %s16, 3
        %s140 = smul.addr %s139, 8
        %s141 = scalar_lea.vmem %s1, %s140
        %p142 = scmp.lt.s32.totalorder %s16, 3
        %s143 = scalar_select %p142, %s16, 3
        %s144 = smul.addr %s143, 8
        %s145 = scalar_lea.vmem %s2, %s144
        %p146 = scmp.eq.s32.totalorder %s16, 0
        // Predicated region
        $region29: #{triplet_loss.1} parent=27 // pred_check
          %p147 = pneg %p146
        $region30: #{triplet_loss.1} parent=27 // pred_check_branch
          %149 = sbr.rel (%p147) target = $region32
        $region31: #{triplet_loss.1} parent=27 // pred_region
          %vm150 = vcmask 7168
          %151 = vst.msk [vmem:[#allocation2] sm:$0xff] %vm150, 0.0
          %152 = vst.msk [vmem:[#allocation3] sm:$0xff] %vm150, 0.0
        $region32: #{triplet_loss.1} parent=27 // pred_fallthru
          _
        %v153 = vld [vmem:[%s141] sm:$0xff]
        %v154 = vld [vmem:[%s145] sm:$0xff]
        %s155 = sld [smem:[#allocation5]]
        %v156 = vlaneseq
        %v157 = vshrl.u32 %v156, 7
        %v158 = vlaneseq
        %v159 = vand.u32 %v158, 127
        %v160 = vstv %s155
        %v161 = vsub.s32 %v157, %v160
        %vm162 = vcmp.eq.s32.totalorder %v159, %v161
        %v163 = vadd.s32 %v161, 8
        %vm164 = vcmp.eq.s32.totalorder %v159, %v163
        %vm165 = vmor %vm162, %vm164
        %v166 = vsel %vm165, 1, 0
        %v167 = vcvt.s32.f32 %v166
        %vm168 = vcmask 64512
        %v170 = vsel %vm168, %v167, 0
        %172 = vmatprep.subr.mxu0 0.0
        %173 = vmatpush1.msra.mxu0 %v154
        %174 = vmatprep.subr.mxu0 0.0
        %175 = vmatpush1.msra.mxu0 0.0
        %176 = vmatprep.subr.mxu0 0.0
        %177 = vmatpush1.msra.mxu0 0.0
        %178 = vmatprep.subr.mxu0 0.0
        %179 = vmatpush1.msra.mxu0 0.0
        %180 = vmatprep.subr.mxu0 0.0
        %181 = vmatpush1.msra.mxu0 0.0
        %182 = vmatprep.subr.mxu0 0.0
        %183 = vmatpush1.msra.mxu0 0.0
        %184 = vmatprep.subr.mxu0 0.0
        %185 = vmatpush1.msra.mxu0 0.0
        %186 = vmatprep.subr.mxu0 0.0
        %187 = vmatpush1.msra.mxu0 0.0
        %188 = vmatprep.subr.mxu0 0.0
        %189 = vmatpush1.msra.mxu0 0.0
        %190 = vmatprep.subr.mxu0 0.0
        %191 = vmatpush1.msra.mxu0 0.0
        %192 = vmatprep.subr.mxu0 0.0
        %193 = vmatpush1.msra.mxu0 0.0
        %194 = vmatprep.subr.mxu0 0.0
        %195 = vmatpush1.msra.mxu0 0.0
        %196 = vmatprep.subr.mxu0 0.0
        %197 = vmatpush1.msra.mxu0 0.0
        %198 = vmatprep.subr.mxu0 0.0
        %199 = vmatpush1.msra.mxu0 0.0
        %200 = vmatprep.subr.mxu0 0.0
        %201 = vmatpush1.msra.mxu0 0.0
        %202 = vmatprep.subr.mxu0 0.0
        %203 = vmatpush1.msra.mxu0 0.0
        %204 = vmatprep.subr.mxu0 0.0
        %205 = vmatpush1.msra.mxu0 0.0
        %206 = vmatprep.subr.mxu0 0.0
        %207 = vmatpush1.msra.mxu0 0.0
        %208 = vmatprep.subr.mxu0 0.0
        %209 = vmatpush1.msra.mxu0 0.0
        %210 = vmatprep.subr.mxu0 0.0
        %211 = vmatpush1.msra.mxu0 0.0
        %212 = vmatprep.subr.mxu0 0.0
        %213 = vmatpush1.msra.mxu0 0.0
        %214 = vmatprep.subr.mxu0 0.0
        %215 = vmatpush1.msra.mxu0 0.0
        %216 = vmatprep.subr.mxu0 0.0
        %217 = vmatpush1.msra.mxu0 0.0
        %218 = vmatprep.subr.mxu0 0.0
        %219 = vmatpush1.msra.mxu0 0.0
        %220 = vmatprep.subr.mxu0 0.0
        %221 = vmatpush1.msra.mxu0 0.0
        %222 = vmatprep.subr.mxu0 0.0
        %223 = vmatpush1.msra.mxu0 0.0
        %224 = vmatprep.subr.mxu0 0.0
        %225 = vmatpush1.msra.mxu0 0.0
        %226 = vmatprep.subr.mxu0 0.0
        %227 = vmatpush1.msra.mxu0 0.0
        %228 = vmatprep.subr.mxu0 0.0
        %229 = vmatpush1.msra.mxu0 0.0
        %230 = vmatprep.subr.mxu0 0.0
        %231 = vmatpush1.msra.mxu0 0.0
        %232 = vmatprep.subr.mxu0 0.0
        %233 = vmatpush1.msra.mxu0 0.0
        %234 = vmatprep.subr.mxu0 0.0
        %235 = vmatpush1.msra.mxu0 0.0
        %236 = vmatprep.mubr.f32.mxu0 0.0
        %237 = vmatmul.mubr.f32.gmra.mrb[0].mxu0 %v170
        %v238 = vpop.f32.mrb[0].mxu0
        %v239 = vadd.f32 0.0, %v238
        %v240 = vpop.f32.mrb[0].mxu0
        %241 = vdwg.mxu0
        %v242 = vld [vmem:[#allocation2] sm:$0xff]
        %v243 = vsub.f32 %v153, %v154
        %v244 = vadd.f32 %v243, 1e-06
        %v245 = vmul.f32 %v244, %v244
        %246 = vadd.xlane.f32.xlu0 %v245
        %v247 = vpop.xlane.xlu0 %246
        %v248 = vadd.f32 %v242, %v247
        %vm249 = vcmask 7168
        %250 = vst.msk [vmem:[#allocation2] sm:$0xff] %vm249, %v248
        %v251 = vld [vmem:[#allocation3] sm:$0xff]
        %v252 = vsub.f32 %v153, %v239
        %v253 = vadd.f32 %v252, 1e-06
        %v254 = vmul.f32 %v253, %v253
        %255 = vadd.xlane.f32.xlu0 %v254
        %v256 = vpop.xlane.xlu0 %255
        %v257 = vadd.f32 %v251, %v256
        %258 = vst.msk [vmem:[#allocation3] sm:$0xff] %vm249, %v257
        %p259 = scmp.eq.s32.totalorder %s16, 3
        // Predicated region
        $region33: #{triplet_loss.1} parent=27 // pred_check
          %p260 = pneg %p259
        $region34: #{triplet_loss.1} parent=27 // pred_check_branch
          %262 = sbr.rel (%p260) target = $region36
        $region35: #{triplet_loss.1} parent=27 // pred_region
          %v263 = vld [vmem:[#allocation2] sm:$0xff]
          %v264 = vrsqrt.pop %v263
          %v265 = vmul.f32 %v263, %v264
          %vm266 = vcmp.eq.f32.partialorder %v263, inf
          %v267 = vsel %vm266, %v263, %v265
          %vm268 = vcmp.eq.f32.partialorder %v263, 0.0
          %v269 = vand.u32 %v263, 2147483648
          %v270 = vsel %vm268, %v269, %v267
          %v271 = vld [vmem:[#allocation3] sm:$0xff]
          %v272 = vrsqrt.pop %v271
          %v273 = vmul.f32 %v271, %v272
          %vm274 = vcmp.eq.f32.partialorder %v271, inf
          %v275 = vsel %vm274, %v271, %v273
          %vm276 = vcmp.eq.f32.partialorder %v271, 0.0
          %v277 = vand.u32 %v271, 2147483648
          %v278 = vsel %vm276, %v277, %v275
          %v279 = vsub.f32 %v270, %v278
          %v280 = vadd.f32 %v279, 0.2
          %v281 = vmax.f32 %v280, 0.0
          %v282 = vsel %vm249, %v281, 0.0
          %283 = vadd.xlane.f32.xlu0 %v282
          %v284 = vpop.xlane.xlu0 %283
          %v285 = vrot.slane %v284, 4
          %v286 = vadd.f32 %v284, %v285
          %v287 = vrot.slane %v286, 2
          %v288 = vadd.f32 %v286, %v287
          %v289 = vrot.slane %v288, 1
          %v290 = vadd.f32 %v288, %v289
          %s291 = vtos %v290
          %v292 = vrcp.pop 8.0
          %s293 = vtos %v292
          %s294 = smul.f32 %s291, %s293
          %v295 = vstv %s294
          %vm296 = vcmask 0
          %297 = vst.msk [vmem:[#allocation6] sm:$0x1] %vm296, %v295
        $region36: #{triplet_loss.1} parent=27 // pred_fallthru
          _
        // Predicated region
        $region37: #{triplet_loss.1} parent=27 // pred_check
          %p298 = pneg %p81
        $region38: #{triplet_loss.1} parent=27 // pred_check_branch
          %300 = sbr.rel (%p298) target = $region40
        $region39: #{triplet_loss.1} parent=27 // pred_region
          %s302 = ssub.s32 16, 16
          %303 = vsyncadd [#allocation7], %s302
          %s305 = sshll.u32 [#allocation6], 4
          %s306 = int_to_ptr.vmem [resolvable:$true] %s305
          %308 = dma.vmem_to_hbm [thread:$0]  %s306, 16, %s3, [#allocation7]
        $region40: #{triplet_loss.1} parent=27 // pred_fallthru
          _
        // Predicated region
        $region41: #{triplet_loss.1} parent=27 // pred_check
          %p309 = pneg %p81
        $region42: #{triplet_loss.1} parent=27 // pred_check_branch
          %311 = sbr.rel (%p309) target = $region44
        $region43: #{triplet_loss.1} parent=27 // pred_region
          %312 = dma.done [#allocation7], 16
        $region44: #{triplet_loss.1} parent=27 // pred_fallthru
          _
      $region28: #{triplet_loss.1} parent=5 // pred_fallthru
        _
      %p313 = scmp.le.s32.totalorder 2, %s11
      // Predicated region
      $region45: #{triplet_loss.1} parent=5 // pred_check
        %p314 = pneg %p313
      $region46: #{triplet_loss.1} parent=5 // pred_check_branch
        %316 = sbr.rel (%p314) target = $region48
      $region47: #{triplet_loss.1} parent=5 // pred_region
        %s317 = ssub.s32 %s11, 2
      $region48: #{triplet_loss.1} parent=5 // pred_fallthru
        _
    $region6: #{triplet_loss.1} parent=1 // loop_footer
      %s15 = sadd.s32 1, %s11
    $region7: #{triplet_loss.1} parent=1 // loop_footer_branch
      %10 = sbr.rel target = $region3
    $region8: #{triplet_loss.1} parent=1 // loop_exit
      _
    %318 = vsyncpa [#allocation7], 1
    %s319 = scalar_lea.sflag [#allocation7], 1
    %320 = vsyncpa %s319, 1

</llo_original>
